<compile_context>
chip_gen: v5e
topology: v5e:2x2
jax: 0.10.0
libtpu: 0.0.40
codegen_flags: <defaults>
</compile_context>

<pallas_src>
import jax
import jax.numpy as jnp
from jax.experimental import pallas as pl
from jax.experimental.pallas import tpu as pltpu


def mlp_kernel(x_ref, w1_ref, b1_ref, w2_ref, b2_ref, wc_ref, bc_ref, o_ref):
    # x tile: (TB, F) bf16.  Everything below keeps the batch dim on lanes.
    x = x_ref[...]

    # Hidden layer 1: h1^T = W1 @ x^T  -> (H1, TB).  "NT" matmul on the MXU
    # (contract the feature dim of both operands), f32 accumulation.
    h = jax.lax.dot_general(
        w1_ref[...], x,
        dimension_numbers=(((1,), (1,)), ((), ())),
        preferred_element_type=jnp.float32)
    h = jnp.maximum(h + b1_ref[...], 0.0)                 # bias (H1,1) bcast over lanes

    # Hidden layer 2: h2^T = W2 @ h1^T -> (H2, TB).
    h = jnp.dot(w2_ref[...], h.astype(jnp.bfloat16),
                preferred_element_type=jnp.float32)
    h = jnp.maximum(h + b2_ref[...], 0.0)

    # Classifier head (out_features = 1): do it on VPU+XLU instead of an N=1
    # MXU matmul: broadcast wc as a column, multiply, reduce over sublanes.
    logits = jnp.sum(h * wc_ref[...], axis=0, keepdims=True) + bc_ref[...]  # (1, TB)

    # Sigmoid: exp and approx-reciprocal both issue on the EUP slot.
    o_ref[...] = pl.reciprocal(1.0 + jnp.exp(-logits), approx=True)


def binary_classifier_mlp(x, params, *, block_batch=256):
    """x: (B, n_inputs) f32.  params: PyTorch-layout weights.  Returns (B,) f32."""
    w1, b1, w2, b2, wc, bc = (
        params["w1"], params["b1"], params["w2"], params["b2"],
        params["wc"], params["bc"],
    )
    B, F = x.shape
    tb = min(block_batch, B)
    grid = (pl.cdiv(B, tb),)

    # bf16 matmul operands (halves DMA bytes for x, 2-4x MXU throughput).
    x_bf16 = x.astype(jnp.bfloat16)
    w1_bf16 = w1.astype(jnp.bfloat16)
    w2_bf16 = w2.astype(jnp.bfloat16)
    wc_col = wc.reshape(-1, 1)          # (H2, 1) column for the sublane-reduce head

    out = pl.pallas_call(
        mlp_kernel,
        out_shape=jax.ShapeDtypeStruct((1, B), jnp.float32),
        grid=grid,
        in_specs=[
            pl.BlockSpec((tb, F), lambda i: (i, 0)),        # x: batch-tiled, pipelined
            pl.BlockSpec(w1_bf16.shape, lambda i: (0, 0)),  # weights/biases: resident
            pl.BlockSpec(b1.shape, lambda i: (0, 0)),
            pl.BlockSpec(w2_bf16.shape, lambda i: (0, 0)),
            pl.BlockSpec(b2.shape, lambda i: (0, 0)),
            pl.BlockSpec(wc_col.shape, lambda i: (0, 0)),
            pl.BlockSpec(bc.shape, lambda i: (0, 0)),
        ],
        out_specs=pl.BlockSpec((1, tb), lambda i: (0, i)),  # lane-dense output slab
        compiler_params=pltpu.CompilerParams(
            dimension_semantics=("parallel",)),             # dual-TC on v7x
    )(x_bf16, w1_bf16, b1, w2_bf16, b2, wc_col, bc)

    # torch .squeeze(): drop the size-1 classifier dim -> shape (B,)
    return jnp.squeeze(out, axis=0)


def init_params(key, n_inputs, hidden):
    """Deterministic synthetic params, PyTorch nn.Linear layout (out, in) + (out, 1)."""
    assert len(hidden) == 2, "this script instantiates the module with 2 hidden layers"
    dims = [n_inputs] + list(hidden) + [1]
    names = ["1", "2", "c"]
    params = {}
    for name, (fan_in, fan_out) in zip(names, zip(dims[:-1], dims[1:])):
        key, kw, kb = jax.random.split(key, 3)
        bound = 1.0 / jnp.sqrt(jnp.float32(fan_in))
        params[f"w{name}"] = jax.random.uniform(
            kw, (fan_out, fan_in), jnp.float32, -bound, bound)
        params[f"b{name}"] = jax.random.uniform(
            kb, (fan_out, 1), jnp.float32, -bound, bound)
    return params


def reference_forward(x, params):
    """Plain-JAX reference with the same mixed precision as the kernel."""
    w1 = params["w1"].astype(jnp.bfloat16)
    w2 = params["w2"].astype(jnp.bfloat16)
    h = jnp.maximum(
        jnp.dot(x.astype(jnp.bfloat16), w1.T, preferred_element_type=jnp.float32)
        + params["b1"].T, 0.0)
    h = jnp.maximum(
        jnp.dot(h.astype(jnp.bfloat16), w2.T, preferred_element_type=jnp.float32)
        + params["b2"].T, 0.0)
    logits = h @ params["wc"].T + params["bc"].T          # f32 head, like the kernel
    return jax.nn.sigmoid(logits).squeeze()


if __name__ == "__main__":
    key = jax.random.PRNGKey(0)
    key, kx = jax.random.split(key)

    # BinaryClassifierMLP(n_inputs=32, hidden=[64, 32], activation_fn=nn.ReLU)
    # B=512 with block_batch=256 -> 2 grid steps (exercises pipelining + lane-dense stores).
    B, n_inputs, hidden = 512, 32, [64, 32]
    x = jax.random.normal(kx, (B, n_inputs), dtype=jnp.float32)
    params = init_params(key, n_inputs, hidden)

    y = binary_classifier_mlp(x, params, block_batch=256)
    y = jax.block_until_ready(y)

    ref = reference_forward(x, params)
    assert y.shape == (B,), y.shape
    assert jnp.allclose(y, ref, atol=5e-3), (
        float(jnp.max(jnp.abs(y - ref))))

    print("KERNEL_OK")
</pallas_src>

<mosaic_0001>
module attributes {stable_mosaic.version = 11 : i64} {
  func.func @mlp_kernel(%arg0: i32, %arg1: memref<256x32xbf16, #tpu.memory_space<vmem>>, %arg2: memref<64x32xbf16, #tpu.memory_space<vmem>>, %arg3: memref<64x1xf32, #tpu.memory_space<vmem>>, %arg4: memref<32x64xbf16, #tpu.memory_space<vmem>>, %arg5: memref<32x1xf32, #tpu.memory_space<vmem>>, %arg6: memref<32x1xf32, #tpu.memory_space<vmem>>, %arg7: memref<1x1xf32, #tpu.memory_space<vmem>>, %arg8: memref<1x256xf32, #tpu.memory_space<vmem>>) attributes {dimension_semantics = [#tpu.dimension_semantics<parallel>], iteration_bounds = array<i64: 2>, scalar_prefetch = 0 : i64, scratch_operands = 0 : i64, tpu.core_type = #tpu.core_type<tc>, window_params = [{transform_indices = @transform_0, window_bounds = array<i64: 256, 32>}, {pipeline_mode = #tpu.pipeline_mode<synchronous>, transform_indices = @transform_1, window_bounds = array<i64: 64, 32>}, {pipeline_mode = #tpu.pipeline_mode<synchronous>, transform_indices = @transform_2, window_bounds = array<i64: 64, 1>}, {pipeline_mode = #tpu.pipeline_mode<synchronous>, transform_indices = @transform_3, window_bounds = array<i64: 32, 64>}, {pipeline_mode = #tpu.pipeline_mode<synchronous>, transform_indices = @transform_4, window_bounds = array<i64: 32, 1>}, {pipeline_mode = #tpu.pipeline_mode<synchronous>, transform_indices = @transform_5, window_bounds = array<i64: 32, 1>}, {pipeline_mode = #tpu.pipeline_mode<synchronous>, transform_indices = @transform_6, window_bounds = array<i64: 1, 1>}, {transform_indices = @transform_7, window_bounds = array<i64: 1, 256>}]} {
    %c0 = arith.constant 0 : index
    %c0_0 = arith.constant 0 : index
    %0 = vector.load %arg1[%c0, %c0_0] : memref<256x32xbf16, #tpu.memory_space<vmem>>, vector<256x32xbf16>
    %c0_1 = arith.constant 0 : index
    %c0_2 = arith.constant 0 : index
    %1 = vector.load %arg2[%c0_1, %c0_2] : memref<64x32xbf16, #tpu.memory_space<vmem>>, vector<64x32xbf16>
    %cst = arith.constant dense<0.000000e+00> : vector<64x256xf32>
    %2 = tpu.matmul %1, %0, %cst {dimension_numbers = #tpu.dot_dimension_numbers<[1], [1], [0], [0], [0, 0, 1, 0], [], []>} : vector<64x32xbf16>, vector<256x32xbf16>, vector<64x256xf32> -> vector<64x256xf32>
    %c0_3 = arith.constant 0 : index
    %c0_4 = arith.constant 0 : index
    %3 = vector.load %arg3[%c0_3, %c0_4] : memref<64x1xf32, #tpu.memory_space<vmem>>, vector<64x1xf32>
    %4 = vector.broadcast %3 : vector<64x1xf32> to vector<64x256xf32>
    %5 = arith.addf %2, %4 : vector<64x256xf32>
    %cst_5 = arith.constant 0.000000e+00 : f32
    %6 = vector.broadcast %cst_5 : f32 to vector<64x256xf32>
    %7 = arith.maximumf %5, %6 : vector<64x256xf32>
    %c0_6 = arith.constant 0 : index
    %c0_7 = arith.constant 0 : index
    %8 = vector.load %arg4[%c0_6, %c0_7] : memref<32x64xbf16, #tpu.memory_space<vmem>>, vector<32x64xbf16>
    %9 = arith.truncf %7 : vector<64x256xf32> to vector<64x256xbf16>
    %cst_8 = arith.constant dense<0.000000e+00> : vector<32x256xf32>
    %10 = tpu.matmul %8, %9, %cst_8 {dimension_numbers = #tpu.dot_dimension_numbers<[1], [0], [0], [1], [0, 0, 1, 1], [], []>} : vector<32x64xbf16>, vector<64x256xbf16>, vector<32x256xf32> -> vector<32x256xf32>
    %c0_9 = arith.constant 0 : index
    %c0_10 = arith.constant 0 : index
    %11 = vector.load %arg5[%c0_9, %c0_10] : memref<32x1xf32, #tpu.memory_space<vmem>>, vector<32x1xf32>
    %12 = vector.broadcast %11 : vector<32x1xf32> to vector<32x256xf32>
    %13 = arith.addf %10, %12 : vector<32x256xf32>
    %cst_11 = arith.constant 0.000000e+00 : f32
    %14 = vector.broadcast %cst_11 : f32 to vector<32x256xf32>
    %15 = arith.maximumf %13, %14 : vector<32x256xf32>
    %c0_12 = arith.constant 0 : index
    %c0_13 = arith.constant 0 : index
    %16 = vector.load %arg6[%c0_12, %c0_13] : memref<32x1xf32, #tpu.memory_space<vmem>>, vector<32x1xf32>
    %17 = vector.broadcast %16 : vector<32x1xf32> to vector<32x256xf32>
    %18 = arith.mulf %15, %17 : vector<32x256xf32>
    %cst_14 = arith.constant dense<0.000000e+00> : vector<256xf32>
    %19 = vector.multi_reduction <add>, %18, %cst_14 [0] : vector<32x256xf32> to vector<256xf32>
    %20 = vector.shape_cast %19 : vector<256xf32> to vector<1x256xf32>
    %c0_15 = arith.constant 0 : index
    %c0_16 = arith.constant 0 : index
    %21 = vector.load %arg7[%c0_15, %c0_16] : memref<1x1xf32, #tpu.memory_space<vmem>>, vector<1x1xf32>
    %22 = vector.broadcast %21 : vector<1x1xf32> to vector<1x256xf32>
    %23 = arith.addf %20, %22 : vector<1x256xf32>
    %cst_17 = arith.constant 0.000000e+00 : f32
    %24 = vector.broadcast %cst_17 : f32 to vector<1x256xf32>
    %25 = arith.subf %24, %23 : vector<1x256xf32>
    %26 = math.exp %25 : vector<1x256xf32>
    %cst_18 = arith.constant 1.000000e+00 : f32
    %27 = vector.broadcast %cst_18 : f32 to vector<1x256xf32>
    %28 = arith.addf %27, %26 : vector<1x256xf32>
    %29 = tpu.reciprocal %28 {approx = true} : vector<1x256xf32> -> vector<1x256xf32>
    %c0_19 = arith.constant 0 : index
    %c0_20 = arith.constant 0 : index
    %30 = vector.load %arg8[%c0_19, %c0_20] : memref<1x256xf32, #tpu.memory_space<vmem>>, vector<1x256xf32>
    tpu.vector_store %arg8[%c0_19, %c0_20], %29 {strides = array<i32>} : memref<1x256xf32, #tpu.memory_space<vmem>>, vector<1x256xf32>,
    return
  }
  func.func @transform_0(%arg0: i32) -> (i32, i32) {
    %c0_i32 = arith.constant 0 : i32
    %c0_i32_0 = arith.constant 0 : i32
    return %arg0, %c0_i32 : i32, i32
  }
  func.func @transform_1(%arg0: i32) -> (i32, i32) {
    %c0_i32 = arith.constant 0 : i32
    %c0_i32_0 = arith.constant 0 : i32
    %c0_i32_1 = arith.constant 0 : i32
    return %c0_i32, %c0_i32_0 : i32, i32
  }
  func.func @transform_2(%arg0: i32) -> (i32, i32) {
    %c0_i32 = arith.constant 0 : i32
    %c0_i32_0 = arith.constant 0 : i32
    %c0_i32_1 = arith.constant 0 : i32
    return %c0_i32, %c0_i32_0 : i32, i32
  }
  func.func @transform_3(%arg0: i32) -> (i32, i32) {
    %c0_i32 = arith.constant 0 : i32
    %c0_i32_0 = arith.constant 0 : i32
    %c0_i32_1 = arith.constant 0 : i32
    return %c0_i32, %c0_i32_0 : i32, i32
  }
  func.func @transform_4(%arg0: i32) -> (i32, i32) {
    %c0_i32 = arith.constant 0 : i32
    %c0_i32_0 = arith.constant 0 : i32
    %c0_i32_1 = arith.constant 0 : i32
    return %c0_i32, %c0_i32_0 : i32, i32
  }
  func.func @transform_5(%arg0: i32) -> (i32, i32) {
    %c0_i32 = arith.constant 0 : i32
    %c0_i32_0 = arith.constant 0 : i32
    %c0_i32_1 = arith.constant 0 : i32
    return %c0_i32, %c0_i32_0 : i32, i32
  }
  func.func @transform_6(%arg0: i32) -> (i32, i32) {
    %c0_i32 = arith.constant 0 : i32
    %c0_i32_0 = arith.constant 0 : i32
    %c0_i32_1 = arith.constant 0 : i32
    return %c0_i32, %c0_i32_0 : i32, i32
  }
  func.func @transform_7(%arg0: i32) -> (i32, i32) {
    %c0_i32 = arith.constant 0 : i32
    %c0_i32_0 = arith.constant 0 : i32
    return %c0_i32, %arg0 : i32, i32
  }
}

</mosaic_0001>

<llo_original>
// kernel: tpu_custom_call.1
$region0: #{tpu_custom_call.1}
  #allocation0 [shape = 'u32[]', space=smem, size = 0x4, offset = 0x4, fixed_abs, tag = 'smem constant byte address 0x4 - core index']
  #allocation1 [shape = 'u32[72,128]{1,0:T(1,128)}', space=vmem, size = 0x9000, scoped, tag = 'internal scratch']
  #allocation2 [shape = 'f32[1,1]{1,0:T(1,128)S(1)}', space=vmem, size = 0x200, scoped, tag = 'scoped memory for tpu_custom_call.1']
  %s0 = inlined_call_operand.vmem [shape: bf16[512,32], index: 0, kind: input, shape index: {}]
  %s1 = inlined_call_operand.vmem [shape: bf16[64,32], index: 1, kind: input, shape index: {}]
  %s2 = inlined_call_operand.vmem [shape: f32[64,1], index: 2, kind: input, shape index: {}]
  %s3 = inlined_call_operand.vmem [shape: bf16[32,64], index: 3, kind: input, shape index: {}]
  %s4 = inlined_call_operand.vmem [shape: f32[32,1], index: 4, kind: input, shape index: {}]
  %s5 = inlined_call_operand.vmem [shape: f32[32,1], index: 5, kind: input, shape index: {}]
  %s6 = inlined_call_operand.<no memory space> [shape: f32[1,1], index: 6, kind: input, shape index: {}]
  %s7 = inlined_call_operand.hbm [shape: f32[1,512], index: 7, kind: output, shape index: {}]
  %s8 = sld [smem:[#allocation0]]
  $region61: #{tpu_custom_call.1} parent=0
    _
  %s10 = ssub.s32 1, %s8
  %s11 = scalar_select 0, %s10, %s8
  %v12 = vstv %s6
  %13 = vst [vmem:[#allocation2] sm:$0x1] %v12
  $region1: #{tpu_custom_call.1} parent=0
    #allocation3 [shape = 'u8[2048]{0}', space=vmem, size = 0x800, scoped, tag = 'output window, operand 0']
    #allocation4 [shape = 's32[2]{0}', space=sflag, size = 0x8, scoped, tag = 'scoped memory for tpu_custom_call.1']
    %14 = vsyncpa [#allocation4], 0
    %s15 = scalar_lea.sflag [#allocation4], 1
    %16 = vsyncpa %s15, 0
    loop: start=0, step=1, limit=4
    $region2: #{tpu_custom_call.1} parent=1 // loop_pre_header
      _
    $region3: #{tpu_custom_call.1} parent=1 // loop_header
      %s18 = sphi 0, %s22
      %p19 = scmp.ge.s32.totalorder %s18, 4
      %s28 = sphi 0, %s30
      %s31 = sphi 0, %s28
      %s32 = sphi 0, %s31
      %s48 = sphi 0, %s32
      %s52 = sphi 0, %s52
      %s54 = sphi 0, %s52
      %s55 = sphi 0, %s54
      %s69 = sphi 0, %s55
      %s73 = sphi 0, %s73
      %s75 = sphi 0, %s73
      %s76 = sphi 0, %s75
      %s90 = sphi 0, %s76
      %s94 = sphi 0, %s94
      %s96 = sphi 0, %s94
      %s97 = sphi 0, %s96
      %s111 = sphi 0, %s97
      %s115 = sphi 0, %s115
      %s117 = sphi 0, %s115
      %s118 = sphi 0, %s117
      %s132 = sphi 0, %s118
      %s136 = sphi 0, %s136
      %s138 = sphi 0, %s136
      %s139 = sphi 0, %s138
      %s153 = sphi 0, %s139
      %s157 = sphi 0, %s157
      %s159 = sphi 0, %s157
      %s160 = sphi 0, %s159
      %s174 = sphi 0, %s160
      %s180 = sphi 0, %s182
      %s183 = sphi 0, %s180
      %s184 = sphi 0, %s183
      %s200 = sphi 0, %s184
    $region4: #{tpu_custom_call.1} parent=1 // loop_header_branch
      %21 = sbr.rel (%p19) target = $region8
    $region5: #{tpu_custom_call.1} parent=1 // loop_body
      %s23 = ssub.s32 %s18, 1
      %s24 = ssub.s32 %s18, 2
      %s25 = sadd.s32 %s18, 1
      %s26 = ssub.s32 %s18, %s25
      %p27 = scmp.eq.s32.totalorder %s26, 0
      %s29 = sadd.s32 %s28, 1
      %s30 = scalar_select %p27, %s28, %s29
      %p33 = pneg %p27
      %p34 = scmp.eq.s32.totalorder %s18, 1
      %p35 = por %p33, %p34
      %p36 = scmp.ne.s32.totalorder %s28, %s31
      %p37 = scmp.eq.s32.totalorder %s18, 0
      %p38 = por %p36, %p37
      %p39 = scmp.ne.s32.totalorder %s28, %s31
      %p40 = scmp.eq.s32.totalorder %s23, 1
      %p41 = por %p39, %p40
      %p42 = scmp.ne.s32.totalorder %s31, %s32
      %p43 = scmp.eq.s32.totalorder %s23, 0
      %p44 = por %p42, %p43
      %p45 = scmp.ne.s32.totalorder %s31, %s32
      %p46 = scmp.eq.s32.totalorder %s24, 1
      %p47 = por %p45, %p46
      %p49 = scmp.ne.s32.totalorder %s32, %s48
      %p50 = scmp.eq.s32.totalorder %s24, 0
      %p51 = por %p49, %p50
      %s53 = sadd.s32 %s52, 1
      %p56 = scmp.eq.s32.totalorder %s18, 1
      %p57 = scmp.ne.s32.totalorder %s52, %s54
      %p58 = scmp.eq.s32.totalorder %s18, 0
      %p59 = por %p57, %p58
      %p60 = scmp.ne.s32.totalorder %s52, %s54
      %p61 = scmp.eq.s32.totalorder %s23, 1
      %p62 = por %p60, %p61
      %p63 = scmp.ne.s32.totalorder %s54, %s55
      %p64 = scmp.eq.s32.totalorder %s23, 0
      %p65 = por %p63, %p64
      %p66 = scmp.ne.s32.totalorder %s54, %s55
      %p67 = scmp.eq.s32.totalorder %s24, 1
      %p68 = por %p66, %p67
      %p70 = scmp.ne.s32.totalorder %s55, %s69
      %p71 = scmp.eq.s32.totalorder %s24, 0
      %p72 = por %p70, %p71
      %s74 = sadd.s32 %s73, 1
      %p77 = scmp.eq.s32.totalorder %s18, 1
      %p78 = scmp.ne.s32.totalorder %s73, %s75
      %p79 = scmp.eq.s32.totalorder %s18, 0
      %p80 = por %p78, %p79
      %p81 = scmp.ne.s32.totalorder %s73, %s75
      %p82 = scmp.eq.s32.totalorder %s23, 1
      %p83 = por %p81, %p82
      %p84 = scmp.ne.s32.totalorder %s75, %s76
      %p85 = scmp.eq.s32.totalorder %s23, 0
      %p86 = por %p84, %p85
      %p87 = scmp.ne.s32.totalorder %s75, %s76
      %p88 = scmp.eq.s32.totalorder %s24, 1
      %p89 = por %p87, %p88
      %p91 = scmp.ne.s32.totalorder %s76, %s90
      %p92 = scmp.eq.s32.totalorder %s24, 0
      %p93 = por %p91, %p92
      %s95 = sadd.s32 %s94, 1
      %p98 = scmp.eq.s32.totalorder %s18, 1
      %p99 = scmp.ne.s32.totalorder %s94, %s96
      %p100 = scmp.eq.s32.totalorder %s18, 0
      %p101 = por %p99, %p100
      %p102 = scmp.ne.s32.totalorder %s94, %s96
      %p103 = scmp.eq.s32.totalorder %s23, 1
      %p104 = por %p102, %p103
      %p105 = scmp.ne.s32.totalorder %s96, %s97
      %p106 = scmp.eq.s32.totalorder %s23, 0
      %p107 = por %p105, %p106
      %p108 = scmp.ne.s32.totalorder %s96, %s97
      %p109 = scmp.eq.s32.totalorder %s24, 1
      %p110 = por %p108, %p109
      %p112 = scmp.ne.s32.totalorder %s97, %s111
      %p113 = scmp.eq.s32.totalorder %s24, 0
      %p114 = por %p112, %p113
      %s116 = sadd.s32 %s115, 1
      %p119 = scmp.eq.s32.totalorder %s18, 1
      %p120 = scmp.ne.s32.totalorder %s115, %s117
      %p121 = scmp.eq.s32.totalorder %s18, 0
      %p122 = por %p120, %p121
      %p123 = scmp.ne.s32.totalorder %s115, %s117
      %p124 = scmp.eq.s32.totalorder %s23, 1
      %p125 = por %p123, %p124
      %p126 = scmp.ne.s32.totalorder %s117, %s118
      %p127 = scmp.eq.s32.totalorder %s23, 0
      %p128 = por %p126, %p127
      %p129 = scmp.ne.s32.totalorder %s117, %s118
      %p130 = scmp.eq.s32.totalorder %s24, 1
      %p131 = por %p129, %p130
      %p133 = scmp.ne.s32.totalorder %s118, %s132
      %p134 = scmp.eq.s32.totalorder %s24, 0
      %p135 = por %p133, %p134
      %s137 = sadd.s32 %s136, 1
      %p140 = scmp.eq.s32.totalorder %s18, 1
      %p141 = scmp.ne.s32.totalorder %s136, %s138
      %p142 = scmp.eq.s32.totalorder %s18, 0
      %p143 = por %p141, %p142
      %p144 = scmp.ne.s32.totalorder %s136, %s138
      %p145 = scmp.eq.s32.totalorder %s23, 1
      %p146 = por %p144, %p145
      %p147 = scmp.ne.s32.totalorder %s138, %s139
      %p148 = scmp.eq.s32.totalorder %s23, 0
      %p149 = por %p147, %p148
      %p150 = scmp.ne.s32.totalorder %s138, %s139
      %p151 = scmp.eq.s32.totalorder %s24, 1
      %p152 = por %p150, %p151
      %p154 = scmp.ne.s32.totalorder %s139, %s153
      %p155 = scmp.eq.s32.totalorder %s24, 0
      %p156 = por %p154, %p155
      %s158 = sadd.s32 %s157, 1
      %p161 = scmp.eq.s32.totalorder %s18, 1
      %p162 = scmp.ne.s32.totalorder %s157, %s159
      %p163 = scmp.eq.s32.totalorder %s18, 0
      %p164 = por %p162, %p163
      %p165 = scmp.ne.s32.totalorder %s157, %s159
      %p166 = scmp.eq.s32.totalorder %s23, 1
      %p167 = por %p165, %p166
      %p168 = scmp.ne.s32.totalorder %s159, %s160
      %p169 = scmp.eq.s32.totalorder %s23, 0
      %p170 = por %p168, %p169
      %p171 = scmp.ne.s32.totalorder %s159, %s160
      %p172 = scmp.eq.s32.totalorder %s24, 1
      %p173 = por %p171, %p172
      %p175 = scmp.ne.s32.totalorder %s160, %s174
      %p176 = scmp.eq.s32.totalorder %s24, 0
      %p177 = por %p175, %p176
      %s178 = ssub.s32 %s18, %s25
      %p179 = scmp.eq.s32.totalorder %s178, 0
      %s181 = sadd.s32 %s180, 1
      %s182 = scalar_select %p179, %s180, %s181
      %p185 = pneg %p179
      %p186 = scmp.eq.s32.totalorder %s18, 1
      %p187 = por %p185, %p186
      %p188 = scmp.ne.s32.totalorder %s180, %s183
      %p189 = scmp.eq.s32.totalorder %s18, 0
      %p190 = por %p188, %p189
      %p191 = scmp.ne.s32.totalorder %s180, %s183
      %p192 = scmp.eq.s32.totalorder %s23, 1
      %p193 = por %p191, %p192
      %p194 = scmp.ne.s32.totalorder %s183, %s184
      %p195 = scmp.eq.s32.totalorder %s23, 0
      %p196 = por %p194, %p195
      %p197 = scmp.ne.s32.totalorder %s183, %s184
      %p198 = scmp.eq.s32.totalorder %s24, 1
      %p199 = por %p197, %p198
      %p201 = scmp.ne.s32.totalorder %s184, %s200
      %p202 = scmp.eq.s32.totalorder %s24, 0
      %p203 = por %p201, %p202
      %p204 = scmp.le.s32.totalorder 1, %s18
      %p205 = scmp.lt.s32.totalorder %s18, 3
      %p206 = pnand %p204, %p205
      %p207 = pneg %p206
      // Predicated region
      $region9: #{tpu_custom_call.1} parent=5 // pred_check
        _
      $region10: #{tpu_custom_call.1} parent=5 // pred_check_branch
        %209 = sbr.rel (%p206) target = $region12
      $region11: #{tpu_custom_call.1} parent=5 // pred_region
        %s210 = ssub.s32 %s18, 1
        // Predicated region
        $region13: #{tpu_custom_call.1} parent=11 // pred_check
          %p211 = pneg %p65
        $region14: #{tpu_custom_call.1} parent=11 // pred_check_branch
          %213 = sbr.rel (%p211) target = $region16
        $region15: #{tpu_custom_call.1} parent=11 // pred_region
          _
        $region16: #{tpu_custom_call.1} parent=11 // pred_fallthru
          _
        // Predicated region
        $region17: #{tpu_custom_call.1} parent=11 // pred_check
          %p214 = pneg %p86
        $region18: #{tpu_custom_call.1} parent=11 // pred_check_branch
          %216 = sbr.rel (%p214) target = $region20
        $region19: #{tpu_custom_call.1} parent=11 // pred_region
          _
        $region20: #{tpu_custom_call.1} parent=11 // pred_fallthru
          _
        // Predicated region
        $region21: #{tpu_custom_call.1} parent=11 // pred_check
          %p217 = pneg %p107
        $region22: #{tpu_custom_call.1} parent=11 // pred_check_branch
          %219 = sbr.rel (%p217) target = $region24
        $region23: #{tpu_custom_call.1} parent=11 // pred_region
          _
        $region24: #{tpu_custom_call.1} parent=11 // pred_fallthru
          _
        // Predicated region
        $region25: #{tpu_custom_call.1} parent=11 // pred_check
          %p220 = pneg %p128
        $region26: #{tpu_custom_call.1} parent=11 // pred_check_branch
          %222 = sbr.rel (%p220) target = $region28
        $region27: #{tpu_custom_call.1} parent=11 // pred_region
          _
        $region28: #{tpu_custom_call.1} parent=11 // pred_fallthru
          _
        // Predicated region
        $region29: #{tpu_custom_call.1} parent=11 // pred_check
          %p223 = pneg %p149
        $region30: #{tpu_custom_call.1} parent=11 // pred_check_branch
          %225 = sbr.rel (%p223) target = $region32
        $region31: #{tpu_custom_call.1} parent=11 // pred_region
          _
        $region32: #{tpu_custom_call.1} parent=11 // pred_fallthru
          _
        // Predicated region
        $region33: #{tpu_custom_call.1} parent=11 // pred_check
          %p226 = pneg %p170
        $region34: #{tpu_custom_call.1} parent=11 // pred_check_branch
          %228 = sbr.rel (%p226) target = $region36
        $region35: #{tpu_custom_call.1} parent=11 // pred_region
          _
        $region36: #{tpu_custom_call.1} parent=11 // pred_fallthru
          _
      $region12: #{tpu_custom_call.1} parent=5 // pred_fallthru
        _
      %p229 = scmp.lt.s32.totalorder %s18, 2
      // Predicated region
      $region37: #{tpu_custom_call.1} parent=5 // pred_check
        %p230 = pneg %p229
      $region38: #{tpu_custom_call.1} parent=5 // pred_check_branch
        %232 = sbr.rel (%p230) target = $region40
      $region39: #{tpu_custom_call.1} parent=5 // pred_region
        // Predicated region
        $region41: #{tpu_custom_call.1} parent=39 // pred_check
          %p233 = pneg %p38
        $region42: #{tpu_custom_call.1} parent=39 // pred_check_branch
          %235 = sbr.rel (%p233) target = $region44
        $region43: #{tpu_custom_call.1} parent=39 // pred_region
          %s236 = smul.u32 32, %s18
          %p237 = scmp.lt.s32.totalorder %s236, 63
          %s238 = scalar_select %p237, %s236, 63
          %s239 = smul.addr %s238, 4
          %s240 = scalar_lea.vmem %s0, %s239
          %s241 = smul.u32 32, %s18
        $region44: #{tpu_custom_call.1} parent=39 // pred_fallthru
          _
      $region40: #{tpu_custom_call.1} parent=5 // pred_fallthru
        _
      %p242 = scmp.le.s32.totalorder 1, %s18
      %p243 = scmp.lt.s32.totalorder %s18, 3
      %p244 = pnand %p242, %p243
      %p245 = pneg %p244
      // Predicated region
      $region45: #{tpu_custom_call.1} parent=5 // pred_check
        _
      $region46: #{tpu_custom_call.1} parent=5 // pred_check_branch
        %247 = sbr.rel (%p244) target = $region48
      $region47: #{tpu_custom_call.1} parent=5 // pred_region
        %s248 = ssub.s32 %s18, 1
        %s249 = smul.u32 32, %s23
        %p250 = scmp.lt.s32.totalorder %s249, 63
        %s251 = scalar_select %p250, %s249, 63
        %s252 = smul.addr %s251, 4
        %s253 = scalar_lea.vmem %s0, %s252
        %p254 = pneg %p44
        %p255 = pneg %p41
        %p256 = pneg %p65
        %p257 = pneg %p62
        %p258 = pneg %p86
        %p259 = pneg %p83
        %p260 = pneg %p107
        %p261 = pneg %p104
        %p262 = pneg %p128
        %p263 = pneg %p125
        %p264 = pneg %p149
        %p265 = pneg %p146
        %p266 = pneg %p170
        %p267 = pneg %p167
        %p268 = pneg %p196
        %p269 = pneg %p193
        %s270 = sand.u32 %s183, 1
        %s271 = scalar_lea.sflag [#allocation4], %s270
        %s272 = sand.u32 %s183, 1
        %s273 = smul.addr %s272, 2
        %s274 = scalar_lea.vmem [#allocation3], %s273
        %s275 = smul.u32 32, %s23
        %p276 = scmp.lt.s32.totalorder %s275, 63
        %s277 = scalar_select %p276, %s275, 63
        %s278 = smul.addr %s277, 4
        %s279 = scalar_lea.vmem %s0, %s278
        %s280 = smul.u32 32, %s23
        %s281 = smul.u32 2, %s23
        %v283 = vld [vmem:[%s279] sm:$0xf]
        %v284 = vld [vmem:[%s279 + $0x4] sm:$0xf]
        %v285 = vld [vmem:[%s279 + $0x8] sm:$0xf]
        %v286 = vld [vmem:[%s279 + $0xc] sm:$0xf]
        %v287 = vld [vmem:[%s279 + $0x10] sm:$0xf]
        %v288 = vld [vmem:[%s279 + $0x14] sm:$0xf]
        %v289 = vld [vmem:[%s279 + $0x18] sm:$0xf]
        %v290 = vld [vmem:[%s279 + $0x1c] sm:$0xf]
        %v291 = vld [vmem:[%s279 + $0x20] sm:$0xf]
        %v292 = vld [vmem:[%s279 + $0x24] sm:$0xf]
        %v293 = vld [vmem:[%s279 + $0x28] sm:$0xf]
        %v294 = vld [vmem:[%s279 + $0x2c] sm:$0xf]
        %v295 = vld [vmem:[%s279 + $0x30] sm:$0xf]
        %v296 = vld [vmem:[%s279 + $0x34] sm:$0xf]
        %v297 = vld [vmem:[%s279 + $0x38] sm:$0xf]
        %v298 = vld [vmem:[%s279 + $0x3c] sm:$0xf]
        %v299 = vld [vmem:[%s279 + $0x40] sm:$0xf]
        %v300 = vld [vmem:[%s279 + $0x44] sm:$0xf]
        %v301 = vld [vmem:[%s279 + $0x48] sm:$0xf]
        %v302 = vld [vmem:[%s279 + $0x4c] sm:$0xf]
        %v303 = vld [vmem:[%s279 + $0x50] sm:$0xf]
        %v304 = vld [vmem:[%s279 + $0x54] sm:$0xf]
        %v305 = vld [vmem:[%s279 + $0x58] sm:$0xf]
        %v306 = vld [vmem:[%s279 + $0x5c] sm:$0xf]
        %v307 = vld [vmem:[%s279 + $0x60] sm:$0xf]
        %v308 = vld [vmem:[%s279 + $0x64] sm:$0xf]
        %v309 = vld [vmem:[%s279 + $0x68] sm:$0xf]
        %v310 = vld [vmem:[%s279 + $0x6c] sm:$0xf]
        %v311 = vld [vmem:[%s279 + $0x70] sm:$0xf]
        %v312 = vld [vmem:[%s279 + $0x74] sm:$0xf]
        %v313 = vld [vmem:[%s279 + $0x78] sm:$0xf]
        %v314 = vld [vmem:[%s279 + $0x7c] sm:$0xf]
        %v315 = vld [vmem:[%s1] sm:$0xf]
        %v316 = vld [vmem:[%s1 + $0x4] sm:$0xf]
        %v317 = vld [vmem:[%s1 + $0x8] sm:$0xf]
        %v318 = vld [vmem:[%s1 + $0xc] sm:$0xf]
        %v319 = vld [vmem:[%s1 + $0x10] sm:$0xf]
        %v320 = vld [vmem:[%s1 + $0x14] sm:$0xf]
        %v321 = vld [vmem:[%s1 + $0x18] sm:$0xf]
        %v322 = vld [vmem:[%s1 + $0x1c] sm:$0xf]
        %v323 = vld [vmem:[%s2] sm:$0xff]
        %v324 = vld [vmem:[%s2 + $0x8] sm:$0xff]
        %v325 = vld [vmem:[%s2 + $0x10] sm:$0xff]
        %v326 = vld [vmem:[%s2 + $0x18] sm:$0xff]
        %v327 = vld [vmem:[%s2 + $0x20] sm:$0xff]
        %v328 = vld [vmem:[%s2 + $0x28] sm:$0xff]
        %v329 = vld [vmem:[%s2 + $0x30] sm:$0xff]
        %v330 = vld [vmem:[%s2 + $0x38] sm:$0xff]
        %332 = vset.pattern.permute.xlu0 0
        %333 = vperm.xlu0 %332, %v323
        %v334 = vpop.permute.xlu0 %333
        %337 = vset.pattern.permute.xlu0 0
        %338 = vperm.xlu0 %337, %v324
        %v339 = vpop.permute.xlu0 %338
        %342 = vset.pattern.permute.xlu0 0
        %343 = vperm.xlu0 %342, %v325
        %v344 = vpop.permute.xlu0 %343
        %347 = vset.pattern.permute.xlu0 0
        %348 = vperm.xlu0 %347, %v326
        %v349 = vpop.permute.xlu0 %348
        %352 = vset.pattern.permute.xlu0 0
        %353 = vperm.xlu0 %352, %v327
        %v354 = vpop.permute.xlu0 %353
        %357 = vset.pattern.permute.xlu0 0
        %358 = vperm.xlu0 %357, %v328
        %v359 = vpop.permute.xlu0 %358
        %362 = vset.pattern.permute.xlu0 0
        %363 = vperm.xlu0 %362, %v329
        %v364 = vpop.permute.xlu0 %363
        %367 = vset.pattern.permute.xlu0 0
        %368 = vperm.xlu0 %367, %v330
        %v369 = vpop.permute.xlu0 %368
        %v379 = vunpack.c.l.b16 %v315
        %v380 = vunpack.c.l.b16 %v316
        %v381 = vunpack.c.l.b16 %v317
        %v382 = vunpack.c.l.b16 %v318
        %v383 = vunpack.c.l.b16 %v319
        %v384 = vunpack.c.l.b16 %v320
        %v385 = vunpack.c.l.b16 %v321
        %v386 = vunpack.c.l.b16 %v322
        %v387 = vpack.c.b16 %v380, %v379
        %v388 = vpack.c.b16 %v382, %v381
        %v389 = vpack.c.b16 %v384, %v383
        %v390 = vpack.c.b16 %v386, %v385
        %v423 = vunpack.c.l.b16 %v283
        %v424 = vunpack.c.l.b16 %v284
        %v425 = vunpack.c.l.b16 %v285
        %v426 = vunpack.c.l.b16 %v286
        %v427 = vunpack.c.l.b16 %v287
        %v428 = vunpack.c.l.b16 %v288
        %v429 = vunpack.c.l.b16 %v289
        %v430 = vunpack.c.l.b16 %v290
        %v431 = vunpack.c.l.b16 %v291
        %v432 = vunpack.c.l.b16 %v292
        %v433 = vunpack.c.l.b16 %v293
        %v434 = vunpack.c.l.b16 %v294
        %v435 = vunpack.c.l.b16 %v295
        %v436 = vunpack.c.l.b16 %v296
        %v437 = vunpack.c.l.b16 %v297
        %v438 = vunpack.c.l.b16 %v298
        %v439 = vunpack.c.l.b16 %v299
        %v440 = vunpack.c.l.b16 %v300
        %v441 = vunpack.c.l.b16 %v301
        %v442 = vunpack.c.l.b16 %v302
        %v443 = vunpack.c.l.b16 %v303
        %v444 = vunpack.c.l.b16 %v304
        %v445 = vunpack.c.l.b16 %v305
        %v446 = vunpack.c.l.b16 %v306
        %v447 = vunpack.c.l.b16 %v307
        %v448 = vunpack.c.l.b16 %v308
        %v449 = vunpack.c.l.b16 %v309
        %v450 = vunpack.c.l.b16 %v310
        %v451 = vunpack.c.l.b16 %v311
        %v452 = vunpack.c.l.b16 %v312
        %v453 = vunpack.c.l.b16 %v313
        %v454 = vunpack.c.l.b16 %v314
        %v455 = vpack.c.b16 %v424, %v423
        %v456 = vpack.c.b16 %v426, %v425
        %v457 = vpack.c.b16 %v428, %v427
        %v458 = vpack.c.b16 %v430, %v429
        %v459 = vpack.c.b16 %v432, %v431
        %v460 = vpack.c.b16 %v434, %v433
        %v461 = vpack.c.b16 %v436, %v435
        %v462 = vpack.c.b16 %v438, %v437
        %v463 = vpack.c.b16 %v440, %v439
        %v464 = vpack.c.b16 %v442, %v441
        %v465 = vpack.c.b16 %v444, %v443
        %v466 = vpack.c.b16 %v446, %v445
        %v467 = vpack.c.b16 %v448, %v447
        %v468 = vpack.c.b16 %v450, %v449
        %v469 = vpack.c.b16 %v452, %v451
        %v470 = vpack.c.b16 %v454, %v453
        %vm471 = vcmask 261120
        %v473 = vsel %vm471, %v387, 0
        %v476 = vsel %vm471, %v388, 0
        %v479 = vsel %vm471, %v389, 0
        %v482 = vsel %vm471, %v390, 0
        %v485 = vsel %vm471, %v455, 0
        %v488 = vsel %vm471, %v456, 0
        %v491 = vsel %vm471, %v457, 0
        %v494 = vsel %vm471, %v458, 0
        %v497 = vsel %vm471, %v459, 0
        %v500 = vsel %vm471, %v460, 0
        %v503 = vsel %vm471, %v461, 0
        %v506 = vsel %vm471, %v462, 0
        %v509 = vsel %vm471, %v463, 0
        %v512 = vsel %vm471, %v464, 0
        %v515 = vsel %vm471, %v465, 0
        %v518 = vsel %vm471, %v466, 0
        %v521 = vsel %vm471, %v467, 0
        %v524 = vsel %vm471, %v468, 0
        %v527 = vsel %vm471, %v469, 0
        %v530 = vsel %vm471, %v470, 0
        %532 = vmatpush.bf16.xpose.msra.mxu0 %v506
        %533 = vmatpush.bf16.xpose.msra.mxu0 %v503
        %534 = vmatpush.bf16.xpose.msra.mxu0 %v500
        %535 = vmatpush.bf16.xpose.msra.mxu0 %v497
        %536 = vmatpush.bf16.xpose.msra.mxu0 %v494
        %537 = vmatpush.bf16.xpose.msra.mxu0 %v491
        %538 = vmatpush.bf16.xpose.msra.mxu0 %v488
        %539 = vmatpush.bf16.xpose.msra.mxu0 %v485
        %540 = vmatmul.bf16.gmra.mxu0 %v473
        %v541 = vpop.f32.mrf.mxu0
        %v542 = vadd.f32 %v334, %v541
        %v543 = vpop.f32.mrf.mxu0
        %v544 = vadd.f32 %v339, %v543
        %545 = vmatmul.bf16.gmra.mxu0 %v476
        %v546 = vpop.f32.mrf.mxu0
        %v547 = vadd.f32 %v344, %v546
        %v548 = vpop.f32.mrf.mxu0
        %v549 = vadd.f32 %v349, %v548
        %550 = vmatmul.bf16.gmra.mxu0 %v479
        %v551 = vpop.f32.mrf.mxu0
        %v552 = vadd.f32 %v354, %v551
        %v553 = vpop.f32.mrf.mxu0
        %v554 = vadd.f32 %v359, %v553
        %555 = vmatmul.bf16.gmra.mxu0 %v482
        %v556 = vpop.f32.mrf.mxu0
        %v557 = vadd.f32 %v364, %v556
        %v558 = vpop.f32.mrf.mxu0
        %v559 = vadd.f32 %v369, %v558
        %560 = vdwg.mxu0
        %561 = vmatpush.bf16.xpose.msra.mxu0 %v530
        %562 = vmatpush.bf16.xpose.msra.mxu0 %v527
        %563 = vmatpush.bf16.xpose.msra.mxu0 %v524
        %564 = vmatpush.bf16.xpose.msra.mxu0 %v521
        %565 = vmatpush.bf16.xpose.msra.mxu0 %v518
        %566 = vmatpush.bf16.xpose.msra.mxu0 %v515
        %567 = vmatpush.bf16.xpose.msra.mxu0 %v512
        %568 = vmatpush.bf16.xpose.msra.mxu0 %v509
        %569 = vmatmul.bf16.gmra.mxu0 %v473
        %v570 = vpop.f32.mrf.mxu0
        %v571 = vadd.f32 %v334, %v570
        %v572 = vpop.f32.mrf.mxu0
        %v573 = vadd.f32 %v339, %v572
        %574 = vmatmul.bf16.gmra.mxu0 %v476
        %v575 = vpop.f32.mrf.mxu0
        %v576 = vadd.f32 %v344, %v575
        %v577 = vpop.f32.mrf.mxu0
        %v578 = vadd.f32 %v349, %v577
        %579 = vmatmul.bf16.gmra.mxu0 %v479
        %v580 = vpop.f32.mrf.mxu0
        %v581 = vadd.f32 %v354, %v580
        %v582 = vpop.f32.mrf.mxu0
        %v583 = vadd.f32 %v359, %v582
        %584 = vmatmul.bf16.gmra.mxu0 %v482
        %v585 = vpop.f32.mrf.mxu0
        %v586 = vadd.f32 %v364, %v585
        %v587 = vpop.f32.mrf.mxu0
        %v588 = vadd.f32 %v369, %v587
        %589 = vdwg.mxu0
        %v590 = vmax.f32 %v542, 0.0
        %v591 = vmax.f32 %v571, 0.0
        %v592 = vmax.f32 %v544, 0.0
        %v593 = vmax.f32 %v573, 0.0
        %v594 = vmax.f32 %v547, 0.0
        %v595 = vmax.f32 %v576, 0.0
        %v596 = vmax.f32 %v549, 0.0
        %v597 = vmax.f32 %v578, 0.0
        %v598 = vmax.f32 %v552, 0.0
        %v599 = vmax.f32 %v581, 0.0
        %v600 = vmax.f32 %v554, 0.0
        %v601 = vmax.f32 %v583, 0.0
        %v602 = vmax.f32 %v557, 0.0
        %v603 = vmax.f32 %v586, 0.0
        %v604 = vmax.f32 %v559, 0.0
        %v605 = vmax.f32 %v588, 0.0
        %v606 = vld [vmem:[%s3] sm:$0xf]
        %v607 = vld [vmem:[%s3 + $0x4] sm:$0xf]
        %v608 = vld [vmem:[%s3 + $0x8] sm:$0xf]
        %v609 = vld [vmem:[%s3 + $0xc] sm:$0xf]
        %v610 = vpack.c.bf16 %v592, %v590
        %v611 = vpack.c.bf16 %v593, %v591
        %v612 = vpack.c.bf16 %v596, %v594
        %v613 = vpack.c.bf16 %v597, %v595
        %v614 = vpack.c.bf16 %v600, %v598
        %v615 = vpack.c.bf16 %v601, %v599
        %v616 = vpack.c.bf16 %v604, %v602
        %v617 = vpack.c.bf16 %v605, %v603
        %v618 = vld [vmem:[%s4] sm:$0xff]
        %v619 = vld [vmem:[%s4 + $0x8] sm:$0xff]
        %v620 = vld [vmem:[%s4 + $0x10] sm:$0xff]
        %v621 = vld [vmem:[%s4 + $0x18] sm:$0xff]
        %623 = vset.pattern.permute.xlu0 0
        %624 = vperm.xlu0 %623, %v618
        %v625 = vpop.permute.xlu0 %624
        %628 = vset.pattern.permute.xlu0 0
        %629 = vperm.xlu0 %628, %v619
        %v630 = vpop.permute.xlu0 %629
        %633 = vset.pattern.permute.xlu0 0
        %634 = vperm.xlu0 %633, %v620
        %v635 = vpop.permute.xlu0 %634
        %638 = vset.pattern.permute.xlu0 0
        %639 = vperm.xlu0 %638, %v621
        %v640 = vpop.permute.xlu0 %639
        %v646 = vunpack.c.l.b16 %v606
        %v647 = vunpack.c.l.b16 %v607
        %v648 = vunpack.c.l.b16 %v608
        %v649 = vunpack.c.l.b16 %v609
        %v650 = vpack.c.b16 %v647, %v646
        %v651 = vpack.c.b16 %v649, %v648
        %vm652 = vcmask 523264
        %v654 = vsel %vm652, %v650, 0
        %v657 = vsel %vm652, %v651, 0
        %659 = vmatpush.bf16.msra.mxu0 0
        %660 = vmatpush.bf16.msra.mxu0 0
        %661 = vmatpush.bf16.msra.mxu0 0
        %662 = vmatpush.bf16.msra.mxu0 0
        %663 = vmatpush.bf16.msra.mxu0 %v616
        %664 = vmatpush.bf16.msra.mxu0 %v614
        %665 = vmatpush.bf16.msra.mxu0 %v612
        %666 = vmatpush.bf16.msra.mxu0 %v610
        %667 = vmatmul.bf16.gmra.mxu0 %v654
        %v668 = vpop.f32.mrf.mxu0
        %v669 = vadd.f32 %v625, %v668
        %v670 = vpop.f32.mrf.mxu0
        %v671 = vadd.f32 %v630, %v670
        %672 = vmatmul.bf16.gmra.mxu0 %v657
        %v673 = vpop.f32.mrf.mxu0
        %v674 = vadd.f32 %v635, %v673
        %v675 = vpop.f32.mrf.mxu0
        %v676 = vadd.f32 %v640, %v675
        %677 = vdwg.mxu0
        %678 = vmatpush.bf16.msra.mxu0 0
        %679 = vmatpush.bf16.msra.mxu0 0
        %680 = vmatpush.bf16.msra.mxu0 0
        %681 = vmatpush.bf16.msra.mxu0 0
        %682 = vmatpush.bf16.msra.mxu0 %v617
        %683 = vmatpush.bf16.msra.mxu0 %v615
        %684 = vmatpush.bf16.msra.mxu0 %v613
        %685 = vmatpush.bf16.msra.mxu0 %v611
        %686 = vmatmul.bf16.gmra.mxu0 %v654
        %v687 = vpop.f32.mrf.mxu0
        %v688 = vadd.f32 %v625, %v687
        %v689 = vpop.f32.mrf.mxu0
        %v690 = vadd.f32 %v630, %v689
        %691 = vmatmul.bf16.gmra.mxu0 %v657
        %v692 = vpop.f32.mrf.mxu0
        %v693 = vadd.f32 %v635, %v692
        %v694 = vpop.f32.mrf.mxu0
        %v695 = vadd.f32 %v640, %v694
        %696 = vdwg.mxu0
        %v697 = vmax.f32 %v669, 0.0
        %v698 = vmax.f32 %v688, 0.0
        %v699 = vmax.f32 %v671, 0.0
        %v700 = vmax.f32 %v690, 0.0
        %v701 = vmax.f32 %v674, 0.0
        %v702 = vmax.f32 %v693, 0.0
        %v703 = vmax.f32 %v676, 0.0
        %v704 = vmax.f32 %v695, 0.0
        %v705 = vld [vmem:[%s5] sm:$0xff]
        %v706 = vld [vmem:[%s5 + $0x8] sm:$0xff]
        %v707 = vld [vmem:[%s5 + $0x10] sm:$0xff]
        %v708 = vld [vmem:[%s5 + $0x18] sm:$0xff]
        %710 = vset.pattern.permute.xlu0 0
        %711 = vperm.xlu0 %710, %v705
        %v712 = vpop.permute.xlu0 %711
        %715 = vset.pattern.permute.xlu0 0
        %716 = vperm.xlu0 %715, %v706
        %v717 = vpop.permute.xlu0 %716
        %720 = vset.pattern.permute.xlu0 0
        %721 = vperm.xlu0 %720, %v707
        %v722 = vpop.permute.xlu0 %721
        %725 = vset.pattern.permute.xlu0 0
        %726 = vperm.xlu0 %725, %v708
        %v727 = vpop.permute.xlu0 %726
        %v729 = vmul.f32 %v697, %v712
        %v730 = vmul.f32 %v698, %v712
        %v731 = vmul.f32 %v699, %v717
        %v732 = vmul.f32 %v700, %v717
        %v733 = vmul.f32 %v701, %v722
        %v734 = vmul.f32 %v702, %v722
        %v735 = vmul.f32 %v703, %v727
        %v736 = vmul.f32 %v704, %v727
        %v737 = vadd.f32 %v729, %v731
        %v738 = vadd.f32 %v737, %v733
        %v739 = vadd.f32 %v738, %v735
        %v740 = vrot.slane %v739, 4
        %v741 = vadd.f32 %v739, %v740
        %v742 = vrot.slane %v741, 2
        %v743 = vadd.f32 %v741, %v742
        %v744 = vrot.slane %v743, 1
        %v745 = vadd.f32 %v743, %v744
        %v746 = vadd.f32 %v730, %v732
        %v747 = vadd.f32 %v746, %v734
        %v748 = vadd.f32 %v747, %v736
        %v749 = vrot.slane %v748, 4
        %v750 = vadd.f32 %v748, %v749
        %v751 = vrot.slane %v750, 2
        %v752 = vadd.f32 %v750, %v751
        %v753 = vrot.slane %v752, 1
        %v754 = vadd.f32 %v752, %v753
        %v755 = vld [vmem:[#allocation2] sm:$0x1]
        %757 = vset.pattern.permute.xlu0 0
        %758 = vperm.xlu0 %757, %v755
        %v759 = vpop.permute.xlu0 %758
        %v761 = vperm.slane %v759, 0
        %v762 = vadd.f32 %v745, %v761
        %v763 = vadd.f32 %v754, %v761
        %v764 = vsub.f32 0.0, %v762
        %v765 = vsub.f32 0.0, %v763
        %v766 = vmul.f32 %v764, 1.442695
        %v767 = vpow.pop %v766
        %v768 = vmul.f32 %v765, 1.442695
        %v769 = vpow.pop %v768
        %v770 = vadd.f32 %v767, 1.0
        %v771 = vadd.f32 %v769, 1.0
        %v772 = vrcp.pop %v770
        %v773 = vrcp.pop %v771
        %v776 = vrot.slane %v773, 7
        %vm777 = vcmask 1040384
        %v778 = vsel %vm777, %v772, %v776
        %v780 = vlaneseq
        %vm781 = vcmp.ge.s32.totalorder %v780, 0
        %vm782 = vcmp.lt.s32.totalorder %v780, 256
        %vm783 = vmand %vm781, %vm782
        %784 = vst.msk [vmem:[%s274] sm:$0x3] %vm783, %v778
        %s785 = sand.u32 %s183, 1
        %s786 = scalar_lea.sflag [#allocation4], %s785
        %s787 = sand.u32 %s183, 1
        %s788 = smul.addr %s787, 2
        %s789 = scalar_lea.vmem [#allocation3], %s788
        // Predicated region
        $region49: #{tpu_custom_call.1} parent=47 // pred_check
          %p790 = pneg %p193
        $region50: #{tpu_custom_call.1} parent=47 // pred_check_branch
          %792 = sbr.rel (%p790) target = $region52
        $region51: #{tpu_custom_call.1} parent=47 // pred_region
          %s793 = smul.u32 2, %s23
          %795 = vsyncadd %s786, 0
          %s796 = scalar_lea.hbm %s7, %s793
          %s798 = sshll.u32 %s789, 4
          %s799 = int_to_ptr.vmem [resolvable:$true] %s798
          %s800 = sshll.u32 %s796, 4
          %s801 = int_to_ptr.hbm [resolvable:$true] %s800
          %803 = dma.vmem_to_hbm [thread:$0]  %s799, 32, %s801, %s786
        $region52: #{tpu_custom_call.1} parent=47 // pred_fallthru
          _
      $region48: #{tpu_custom_call.1} parent=5 // pred_fallthru
        _
      %p804 = scmp.le.s32.totalorder 2, %s18
      // Predicated region
      $region53: #{tpu_custom_call.1} parent=5 // pred_check
        %p805 = pneg %p804
      $region54: #{tpu_custom_call.1} parent=5 // pred_check_branch
        %807 = sbr.rel (%p805) target = $region56
      $region55: #{tpu_custom_call.1} parent=5 // pred_region
        %s808 = ssub.s32 %s18, 2
        // Predicated region
        $region57: #{tpu_custom_call.1} parent=55 // pred_check
          %p809 = pneg %p199
        $region58: #{tpu_custom_call.1} parent=55 // pred_check_branch
          %811 = sbr.rel (%p809) target = $region60
        $region59: #{tpu_custom_call.1} parent=55 // pred_region
          %s812 = sand.u32 %s184, 1
          %s813 = scalar_lea.sflag [#allocation4], %s812
          %s814 = sand.u32 %s184, 1
          %s815 = smul.addr %s814, 2
          %s816 = scalar_lea.vmem [#allocation3], %s815
          %818 = dma.done %s813, 32
        $region60: #{tpu_custom_call.1} parent=55 // pred_fallthru
          _
      $region56: #{tpu_custom_call.1} parent=5 // pred_fallthru
        _
    $region6: #{tpu_custom_call.1} parent=1 // loop_footer
      %s22 = sadd.s32 1, %s18
    $region7: #{tpu_custom_call.1} parent=1 // loop_footer_branch
      %17 = sbr.rel target = $region3
    $region8: #{tpu_custom_call.1} parent=1 // loop_exit
      _
    %819 = vsyncpa [#allocation4], 1
    %s820 = scalar_lea.sflag [#allocation4], 1
    %821 = vsyncpa %s820, 1

</llo_original>
